<compile_context>
chip_gen: v7x
topology: tpu7x:2x2x1
jax: 0.10.0
libtpu: 0.0.40
codegen_flags: <defaults>
</compile_context>

<pallas_src>
import functools

import jax
import jax.numpy as jnp
from jax.experimental import pallas as pl
from jax.experimental.pallas import tpu as pltpu

_MIB = 1024 * 1024


def scf_kernel(x_ref, w_ref, m_ref, b_ref, o_ref, *, H, W):
    """One TB-batch block: pools -> outer product -> 1x1 conv (MXU) -> sigmoid."""
    TB, N, L = x_ref.shape
    x = x_ref[...]                                    # (TB, N, L) f32
    x4 = x.reshape(TB, H, W, L)                       # free iff W % 8 == 0

    # Adaptive pools with output == input spatial size are plain means (tiny).
    ah = jnp.mean(x4, axis=1)                         # (TB, W, L)  ap_h (mean over rows)
    aw = jnp.mean(x4, axis=2)                         # (TB, H, L)  ap_w (mean over cols)

    # _hw outer product with the H==W ap_c-broadcast quirk handled in the epilogue.
    # Multiply in f32 (portable), cast the result to bf16 immediately so the MXU
    # operand / dominant full-size temporary is half width.
    y = (ah[:, :, None, :] * aw[:, None, :, :]).astype(jnp.bfloat16)   # (TB, W, H, L)
    y2 = y.reshape(TB * N, L)

    # 1x1 conv on the MXU (f32 accumulation) with ap_c folded in algebraically:
    #   conv(_hw + ap_c) = _hw @ W + mean_c(x) * rowsum_c(W) + b = y2 @ W + x @ M + b
    # The rank-1 f32 matmul against M replaces the old XLU lane-reduce +
    # lane-broadcast + full-size f32 add (MXU has plenty of headroom here).
    pre = jnp.dot(y2, w_ref[...], preferred_element_type=jnp.float32)
    pre = pre + jnp.dot(x.reshape(TB * N, L), m_ref[...],
                        preferred_element_type=jnp.float32)
    act = jax.nn.sigmoid(pre + b_ref[...])            # (TB*N, L_out) f32, EUP

    # Channels-last -> channel-major in VMEM (XLU); wrapper reshape to NCHW is then
    # free.  Cast to the output dtype BEFORE transposing: a bf16 output halves both
    # the vregs pushed through the XLU and the store/HBM traffic; f32 is unchanged.
    act = act.astype(o_ref.dtype).reshape(TB, N, -1)
    o_ref[...] = jnp.swapaxes(act, -1, -2)            # (TB, L_out, N)


def _vmem_config():
    """(vmem_limit_bytes, block-sizing budget) derived from the chip generation."""
    try:
        cap = pltpu.get_tpu_info().vmem_capacity_bytes
    except Exception:            # query unavailable: assume the small (v7x-like) VMEM
        cap = 64 * _MIB
    if cap >= 128 * _MIB:        # v5e / v6e: 128 MiB physical -> let blocks grow
        return 96 * _MIB, 64 * _MIB
    # v7x-class (64 MiB physical): stay well under the physical capacity
    return min(48 * _MIB, (cap * 3) // 4), 24 * _MIB


def _choose_tb(B, N, L, out_itemsize, vmem_budget):
    """Batch elements per grid step.

    Preference order: (1) fits the VMEM budget, (2) >= 4 grid steps so the input
    DMA of step i+1 and the writeback of step i-1 hide under step i (never collapse
    to a single step when B > 1), (3) an even step count so v7x's two TensorCores
    split the 'parallel' batch axis evenly, (4) the largest block satisfying the
    above (fewest steps).
    """
    per_b = N * L * (20 + 3 * out_itemsize)   # in/out blocks (double-buffered) + temps
    cap = max(1, vmem_budget // per_b)
    divisors = [d for d in range(1, B + 1) if B % d == 0]

    def score(tb):
        steps = B // tb
        return (
            tb <= cap,                        # fits VMEM budget
            steps >= 4 or tb == 1,            # enough steps for DMA/compute overlap
            steps % 2 == 0 or B % 2 == 1,     # even split across 2 TensorCores
            tb,                               # then: fewest steps / largest DMAs
        )

    return max(divisors, key=score)


def scf_forward(x, conv_w, conv_b, H, W, *, out_dtype=jnp.float32):
    """x: (B, N, L), N = H*W row-major over (h, w); conv_w: (L_out, L_in); conv_b: (L_out,).

    Returns the PyTorch-shaped NCHW output (B, L_out, W, H).  Set
    out_dtype=jnp.bfloat16 to cut output HBM traffic ~2x (numerics decision).
    """
    B, N, L = x.shape
    assert N == H * W and H == W, "SCF requires H == W (as in the PyTorch module)"
    L_out, L_in = conv_w.shape
    assert L_in == L, (L_in, L)

    w_mat = conv_w.T.astype(jnp.bfloat16)                          # (L_in, L_out)
    # Rank-1 weight carrying the ap_c (per-pixel channel mean) term through the MXU:
    #   (x @ m_mat)[p, o] = mean_c(x[p, :]) * sum_c(conv_w[o, :])
    m_mat = jnp.broadcast_to(jnp.sum(conv_w, axis=1)[None, :] / L,
                             (L, L_out)).astype(jnp.float32)
    b_mat = conv_b.reshape(1, L_out).astype(jnp.float32)

    vmem_limit, budget = _vmem_config()
    TB = _choose_tb(B, N, L, jnp.dtype(out_dtype).itemsize, budget)

    kernel = functools.partial(scf_kernel, H=H, W=W)
    out = pl.pallas_call(
        kernel,
        out_shape=jax.ShapeDtypeStruct((B, L_out, N), out_dtype),
        grid_spec=pltpu.PrefetchScalarGridSpec(
            num_scalar_prefetch=0,
            grid=(B // TB,),
            in_specs=[
                pl.BlockSpec((TB, N, L), lambda b: (b, 0, 0)),     # x, TB-batch tile (f32)
                pl.BlockSpec((L, L_out), lambda b: (0, 0)),        # conv weight (bf16)
                pl.BlockSpec((L, L_out), lambda b: (0, 0)),        # ap_c rank-1 weight (f32)
                pl.BlockSpec((1, L_out), lambda b: (0, 0)),        # conv bias (f32)
            ],
            out_specs=pl.BlockSpec((TB, L_out, N), lambda b: (b, 0, 0)),
        ),
        compiler_params=pltpu.CompilerParams(
            dimension_semantics=("parallel",),
            vmem_limit_bytes=vmem_limit,
        ),
    )(x, w_mat, m_mat, b_mat)

    # (B, L, N) channel-major -> PyTorch NCHW output (B, L, W, H): free reshape.
    return out.reshape(B, L_out, W, H)


def scf_reference(x, conv_w, conv_b, H, W):
    """Pure-JAX mirror of the PyTorch forward, for verification."""
    B, N, L = x.shape
    x1 = jnp.transpose(x, (0, 2, 1)).reshape(B, L, H, W)
    ap_h = jnp.mean(x1, axis=2, keepdims=True)            # (B, L, 1, W)
    ap_w = jnp.mean(x1, axis=3, keepdims=True)            # (B, L, H, 1)
    ap_c = jnp.mean(x, axis=2).reshape(B, 1, H, W)        # (B, 1, H, W)
    hw = jnp.swapaxes(ap_w @ ap_h, -2, -1)                # (B, L, W, H)
    y = hw + ap_c
    out = jnp.einsum("oc,bcij->boij", conv_w, y) + conv_b[None, :, None, None]
    return jax.nn.sigmoid(out)


if __name__ == "__main__":
    B, H, W, L = 2, 8, 8, 32
    N = H * W

    key = jax.random.PRNGKey(0)
    kx, kw, kb = jax.random.split(key, 3)
    x = jax.random.normal(kx, (B, N, L), dtype=jnp.float32)
    conv_w = jax.random.normal(kw, (L, L), dtype=jnp.float32) * 0.1   # (L_out, L_in)
    conv_b = jax.random.normal(kb, (L,), dtype=jnp.float32) * 0.1

    out = jax.block_until_ready(scf_forward(x, conv_w, conv_b, H, W))
    ref = scf_reference(x, conv_w, conv_b, H, W)

    assert out.shape == ref.shape, (out.shape, ref.shape)
    # bf16 matmul inputs (f32 accumulation) vs. pure-f32 reference: loosened tol.
    max_err = float(jnp.max(jnp.abs(out - ref)))
    assert max_err < 1e-2, max_err

    print("KERNEL_OK")
</pallas_src>

<mosaic_0001>
module attributes {stable_mosaic.version = 11 : i64} {
  func.func @scf_kernel(%arg0: i32, %arg1: memref<1x64x32xf32, #tpu.memory_space<vmem>>, %arg2: memref<32x32xbf16, #tpu.memory_space<vmem>>, %arg3: memref<32x32xf32, #tpu.memory_space<vmem>>, %arg4: memref<1x32xf32, #tpu.memory_space<vmem>>, %arg5: memref<1x32x64xf32, #tpu.memory_space<vmem>>) attributes {dimension_semantics = [#tpu.dimension_semantics<parallel>], iteration_bounds = array<i64: 2>, scalar_prefetch = 0 : i64, scratch_operands = 0 : i64, tpu.core_type = #tpu.core_type<tc>, window_params = [{transform_indices = @transform_0, window_bounds = array<i64: 1, 64, 32>}, {pipeline_mode = #tpu.pipeline_mode<synchronous>, transform_indices = @transform_1, window_bounds = array<i64: 32, 32>}, {pipeline_mode = #tpu.pipeline_mode<synchronous>, transform_indices = @transform_2, window_bounds = array<i64: 32, 32>}, {pipeline_mode = #tpu.pipeline_mode<synchronous>, transform_indices = @transform_3, window_bounds = array<i64: 1, 32>}, {transform_indices = @transform_4, window_bounds = array<i64: 1, 32, 64>}]} {
    %c0 = arith.constant 0 : index
    %c0_0 = arith.constant 0 : index
    %c0_1 = arith.constant 0 : index
    %0 = vector.load %arg1[%c0, %c0_0, %c0_1] : memref<1x64x32xf32, #tpu.memory_space<vmem>>, vector<1x64x32xf32>
    %1 = vector.shape_cast %0 : vector<1x64x32xf32> to vector<1x8x8x32xf32>
    %cst = arith.constant dense<0.000000e+00> : vector<1x8x32xf32>
    %2 = vector.multi_reduction <add>, %1, %cst [1] : vector<1x8x8x32xf32> to vector<1x8x32xf32>
    %cst_2 = arith.constant 8.000000e+00 : f32
    %3 = vector.broadcast %cst_2 : f32 to vector<1x8x32xf32>
    %4 = arith.divf %2, %3 : vector<1x8x32xf32>
    %cst_3 = arith.constant dense<0.000000e+00> : vector<1x8x32xf32>
    %5 = vector.multi_reduction <add>, %1, %cst_3 [2] : vector<1x8x8x32xf32> to vector<1x8x32xf32>
    %cst_4 = arith.constant 8.000000e+00 : f32
    %6 = vector.broadcast %cst_4 : f32 to vector<1x8x32xf32>
    %7 = arith.divf %5, %6 : vector<1x8x32xf32>
    %8 = vector.shape_cast %4 : vector<1x8x32xf32> to vector<1x8x1x32xf32>
    %9 = vector.shape_cast %7 : vector<1x8x32xf32> to vector<1x1x8x32xf32>
    %10 = vector.broadcast %8 : vector<1x8x1x32xf32> to vector<1x8x8x32xf32>
    %11 = vector.broadcast %9 : vector<1x1x8x32xf32> to vector<1x8x8x32xf32>
    %12 = arith.mulf %10, %11 : vector<1x8x8x32xf32>
    %13 = arith.truncf %12 : vector<1x8x8x32xf32> to vector<1x8x8x32xbf16>
    %14 = vector.shape_cast %13 : vector<1x8x8x32xbf16> to vector<64x32xbf16>
    %c0_5 = arith.constant 0 : index
    %c0_6 = arith.constant 0 : index
    %15 = vector.load %arg2[%c0_5, %c0_6] : memref<32x32xbf16, #tpu.memory_space<vmem>>, vector<32x32xbf16>
    %cst_7 = arith.constant dense<0.000000e+00> : vector<64x32xf32>
    %16 = tpu.matmul %14, %15, %cst_7 {dimension_numbers = #tpu.dot_dimension_numbers<[1], [0], [0], [1], [0, 0, 1, 1], [], []>} : vector<64x32xbf16>, vector<32x32xbf16>, vector<64x32xf32> -> vector<64x32xf32>
    %17 = vector.shape_cast %0 : vector<1x64x32xf32> to vector<64x32xf32>
    %c0_8 = arith.constant 0 : index
    %c0_9 = arith.constant 0 : index
    %18 = vector.load %arg3[%c0_8, %c0_9] : memref<32x32xf32, #tpu.memory_space<vmem>>, vector<32x32xf32>
    %cst_10 = arith.constant dense<0.000000e+00> : vector<64x32xf32>
    %19 = tpu.matmul %17, %18, %cst_10 {dimension_numbers = #tpu.dot_dimension_numbers<[1], [0], [0], [1], [0, 0, 1, 1], [], []>} : vector<64x32xf32>, vector<32x32xf32>, vector<64x32xf32> -> vector<64x32xf32>
    %20 = arith.addf %16, %19 : vector<64x32xf32>
    %c0_11 = arith.constant 0 : index
    %c0_12 = arith.constant 0 : index
    %21 = vector.load %arg4[%c0_11, %c0_12] : memref<1x32xf32, #tpu.memory_space<vmem>>, vector<1x32xf32>
    %22 = vector.broadcast %21 : vector<1x32xf32> to vector<64x32xf32>
    %23 = arith.addf %20, %22 : vector<64x32xf32>
    %24 = arith.negf %23 : vector<64x32xf32>
    %25 = math.exp %24 : vector<64x32xf32>
    %cst_13 = arith.constant 1.000000e+00 : f32
    %26 = vector.broadcast %cst_13 : f32 to vector<64x32xf32>
    %27 = arith.addf %26, %25 : vector<64x32xf32>
    %28 = arith.divf %26, %27 : vector<64x32xf32>
    %29 = vector.shape_cast %28 : vector<64x32xf32> to vector<1x64x32xf32>
    %30 = tpu.transpose %29, [0, 2, 1] : vector<1x64x32xf32> -> vector<1x32x64xf32>
    %c0_14 = arith.constant 0 : index
    %c0_15 = arith.constant 0 : index
    %c0_16 = arith.constant 0 : index
    %31 = vector.load %arg5[%c0_14, %c0_15, %c0_16] : memref<1x32x64xf32, #tpu.memory_space<vmem>>, vector<1x32x64xf32>
    tpu.vector_store %arg5[%c0_14, %c0_15, %c0_16], %30 {strides = array<i32>} : memref<1x32x64xf32, #tpu.memory_space<vmem>>, vector<1x32x64xf32>,
    return
  }
  func.func @transform_0(%arg0: i32) -> (i32, i32, i32) {
    %c0_i32 = arith.constant 0 : i32
    %c0_i32_0 = arith.constant 0 : i32
    %c0_i32_1 = arith.constant 0 : i32
    return %arg0, %c0_i32, %c0_i32_0 : i32, i32, i32
  }
  func.func @transform_1(%arg0: i32) -> (i32, i32) {
    %c0_i32 = arith.constant 0 : i32
    %c0_i32_0 = arith.constant 0 : i32
    %c0_i32_1 = arith.constant 0 : i32
    return %c0_i32, %c0_i32_0 : i32, i32
  }
  func.func @transform_2(%arg0: i32) -> (i32, i32) {
    %c0_i32 = arith.constant 0 : i32
    %c0_i32_0 = arith.constant 0 : i32
    %c0_i32_1 = arith.constant 0 : i32
    return %c0_i32, %c0_i32_0 : i32, i32
  }
  func.func @transform_3(%arg0: i32) -> (i32, i32) {
    %c0_i32 = arith.constant 0 : i32
    %c0_i32_0 = arith.constant 0 : i32
    %c0_i32_1 = arith.constant 0 : i32
    return %c0_i32, %c0_i32_0 : i32, i32
  }
  func.func @transform_4(%arg0: i32) -> (i32, i32, i32) {
    %c0_i32 = arith.constant 0 : i32
    %c0_i32_0 = arith.constant 0 : i32
    %c0_i32_1 = arith.constant 0 : i32
    return %arg0, %c0_i32, %c0_i32_0 : i32, i32, i32
  }
}

</mosaic_0001>

<llo_original>
// kernel: tpu_custom_call.1
$region0: #{tpu_custom_call.1}
  #allocation0 [shape = 'u32[]', space=smem, size = 0x4, offset = 0x4, fixed_abs, tag = 'smem constant byte address 0x4 - core index']
  #allocation1 [shape = 'u32[144,128]{1,0:T(1,128)}', space=vmem, size = 0x12000, scoped, tag = 'internal scratch']
  %s0 = inlined_call_operand.vmem [shape: f32[2,64,32], index: 0, kind: input, shape index: {}]
  %s1 = inlined_call_operand.vmem [shape: bf16[32,32], index: 1, kind: input, shape index: {}]
  %s2 = inlined_call_operand.vmem [shape: f32[32,32], index: 2, kind: input, shape index: {}]
  %s3 = inlined_call_operand.vmem [shape: f32[1,32], index: 3, kind: input, shape index: {}]
  %s4 = inlined_call_operand.hbm [shape: f32[2,32,64], index: 4, kind: output, shape index: {}]
  %s5 = sld [smem:[#allocation0]]
  $region49: #{tpu_custom_call.1} parent=0
    _
  %s7 = ssub.s32 1, %s5
  %s8 = scalar_select 0, %s7, %s5
  $region1: #{tpu_custom_call.1} parent=0
    #allocation2 [shape = 'u8[32768]{0}', space=vmem, size = 0x8000, scoped, tag = 'output window, operand 0']
    #allocation3 [shape = 's32[2]{0}', space=sflag, size = 0x8, scoped, tag = 'scoped memory for tpu_custom_call.1']
    %9 = vsyncpa [#allocation3], 0
    %s10 = scalar_lea.sflag [#allocation3], 1
    %11 = vsyncpa %s10, 0
    loop: start=0, step=1, limit=4
    $region2: #{tpu_custom_call.1} parent=1 // loop_pre_header
      _
    $region3: #{tpu_custom_call.1} parent=1 // loop_header
      %s13 = sphi 0, %s17
      %p14 = scmp.ge.s32.totalorder %s13, 4
      %s23 = sphi 0, %s25
      %s26 = sphi 0, %s23
      %s27 = sphi 0, %s26
      %s43 = sphi 0, %s27
      %s47 = sphi 0, %s47
      %s49 = sphi 0, %s47
      %s50 = sphi 0, %s49
      %s64 = sphi 0, %s50
      %s68 = sphi 0, %s68
      %s70 = sphi 0, %s68
      %s71 = sphi 0, %s70
      %s85 = sphi 0, %s71
      %s89 = sphi 0, %s89
      %s91 = sphi 0, %s89
      %s92 = sphi 0, %s91
      %s106 = sphi 0, %s92
      %s112 = sphi 0, %s114
      %s115 = sphi 0, %s112
      %s116 = sphi 0, %s115
      %s132 = sphi 0, %s116
    $region4: #{tpu_custom_call.1} parent=1 // loop_header_branch
      %16 = sbr.rel (%p14) target = $region8
    $region5: #{tpu_custom_call.1} parent=1 // loop_body
      %s18 = ssub.s32 %s13, 1
      %s19 = ssub.s32 %s13, 2
      %s20 = sadd.s32 %s13, 1
      %s21 = ssub.s32 %s13, %s20
      %p22 = scmp.eq.s32.totalorder %s21, 0
      %s24 = sadd.s32 %s23, 1
      %s25 = scalar_select %p22, %s23, %s24
      %p28 = pneg %p22
      %p29 = scmp.eq.s32.totalorder %s13, 1
      %p30 = por %p28, %p29
      %p31 = scmp.ne.s32.totalorder %s23, %s26
      %p32 = scmp.eq.s32.totalorder %s13, 0
      %p33 = por %p31, %p32
      %p34 = scmp.ne.s32.totalorder %s23, %s26
      %p35 = scmp.eq.s32.totalorder %s18, 1
      %p36 = por %p34, %p35
      %p37 = scmp.ne.s32.totalorder %s26, %s27
      %p38 = scmp.eq.s32.totalorder %s18, 0
      %p39 = por %p37, %p38
      %p40 = scmp.ne.s32.totalorder %s26, %s27
      %p41 = scmp.eq.s32.totalorder %s19, 1
      %p42 = por %p40, %p41
      %p44 = scmp.ne.s32.totalorder %s27, %s43
      %p45 = scmp.eq.s32.totalorder %s19, 0
      %p46 = por %p44, %p45
      %s48 = sadd.s32 %s47, 1
      %p51 = scmp.eq.s32.totalorder %s13, 1
      %p52 = scmp.ne.s32.totalorder %s47, %s49
      %p53 = scmp.eq.s32.totalorder %s13, 0
      %p54 = por %p52, %p53
      %p55 = scmp.ne.s32.totalorder %s47, %s49
      %p56 = scmp.eq.s32.totalorder %s18, 1
      %p57 = por %p55, %p56
      %p58 = scmp.ne.s32.totalorder %s49, %s50
      %p59 = scmp.eq.s32.totalorder %s18, 0
      %p60 = por %p58, %p59
      %p61 = scmp.ne.s32.totalorder %s49, %s50
      %p62 = scmp.eq.s32.totalorder %s19, 1
      %p63 = por %p61, %p62
      %p65 = scmp.ne.s32.totalorder %s50, %s64
      %p66 = scmp.eq.s32.totalorder %s19, 0
      %p67 = por %p65, %p66
      %s69 = sadd.s32 %s68, 1
      %p72 = scmp.eq.s32.totalorder %s13, 1
      %p73 = scmp.ne.s32.totalorder %s68, %s70
      %p74 = scmp.eq.s32.totalorder %s13, 0
      %p75 = por %p73, %p74
      %p76 = scmp.ne.s32.totalorder %s68, %s70
      %p77 = scmp.eq.s32.totalorder %s18, 1
      %p78 = por %p76, %p77
      %p79 = scmp.ne.s32.totalorder %s70, %s71
      %p80 = scmp.eq.s32.totalorder %s18, 0
      %p81 = por %p79, %p80
      %p82 = scmp.ne.s32.totalorder %s70, %s71
      %p83 = scmp.eq.s32.totalorder %s19, 1
      %p84 = por %p82, %p83
      %p86 = scmp.ne.s32.totalorder %s71, %s85
      %p87 = scmp.eq.s32.totalorder %s19, 0
      %p88 = por %p86, %p87
      %s90 = sadd.s32 %s89, 1
      %p93 = scmp.eq.s32.totalorder %s13, 1
      %p94 = scmp.ne.s32.totalorder %s89, %s91
      %p95 = scmp.eq.s32.totalorder %s13, 0
      %p96 = por %p94, %p95
      %p97 = scmp.ne.s32.totalorder %s89, %s91
      %p98 = scmp.eq.s32.totalorder %s18, 1
      %p99 = por %p97, %p98
      %p100 = scmp.ne.s32.totalorder %s91, %s92
      %p101 = scmp.eq.s32.totalorder %s18, 0
      %p102 = por %p100, %p101
      %p103 = scmp.ne.s32.totalorder %s91, %s92
      %p104 = scmp.eq.s32.totalorder %s19, 1
      %p105 = por %p103, %p104
      %p107 = scmp.ne.s32.totalorder %s92, %s106
      %p108 = scmp.eq.s32.totalorder %s19, 0
      %p109 = por %p107, %p108
      %s110 = ssub.s32 %s13, %s20
      %p111 = scmp.eq.s32.totalorder %s110, 0
      %s113 = sadd.s32 %s112, 1
      %s114 = scalar_select %p111, %s112, %s113
      %p117 = pneg %p111
      %p118 = scmp.eq.s32.totalorder %s13, 1
      %p119 = por %p117, %p118
      %p120 = scmp.ne.s32.totalorder %s112, %s115
      %p121 = scmp.eq.s32.totalorder %s13, 0
      %p122 = por %p120, %p121
      %p123 = scmp.ne.s32.totalorder %s112, %s115
      %p124 = scmp.eq.s32.totalorder %s18, 1
      %p125 = por %p123, %p124
      %p126 = scmp.ne.s32.totalorder %s115, %s116
      %p127 = scmp.eq.s32.totalorder %s18, 0
      %p128 = por %p126, %p127
      %p129 = scmp.ne.s32.totalorder %s115, %s116
      %p130 = scmp.eq.s32.totalorder %s19, 1
      %p131 = por %p129, %p130
      %p133 = scmp.ne.s32.totalorder %s116, %s132
      %p134 = scmp.eq.s32.totalorder %s19, 0
      %p135 = por %p133, %p134
      %p136 = scmp.le.s32.totalorder 1, %s13
      %p137 = scmp.lt.s32.totalorder %s13, 3
      %p138 = pnand %p136, %p137
      %p139 = pneg %p138
      // Predicated region
      $region9: #{tpu_custom_call.1} parent=5 // pred_check
        _
      $region10: #{tpu_custom_call.1} parent=5 // pred_check_branch
        %141 = sbr.rel (%p138) target = $region12
      $region11: #{tpu_custom_call.1} parent=5 // pred_region
        %s142 = ssub.s32 %s13, 1
        // Predicated region
        $region13: #{tpu_custom_call.1} parent=11 // pred_check
          %p143 = pneg %p60
        $region14: #{tpu_custom_call.1} parent=11 // pred_check_branch
          %145 = sbr.rel (%p143) target = $region16
        $region15: #{tpu_custom_call.1} parent=11 // pred_region
          _
        $region16: #{tpu_custom_call.1} parent=11 // pred_fallthru
          _
        // Predicated region
        $region17: #{tpu_custom_call.1} parent=11 // pred_check
          %p146 = pneg %p81
        $region18: #{tpu_custom_call.1} parent=11 // pred_check_branch
          %148 = sbr.rel (%p146) target = $region20
        $region19: #{tpu_custom_call.1} parent=11 // pred_region
          _
        $region20: #{tpu_custom_call.1} parent=11 // pred_fallthru
          _
        // Predicated region
        $region21: #{tpu_custom_call.1} parent=11 // pred_check
          %p149 = pneg %p102
        $region22: #{tpu_custom_call.1} parent=11 // pred_check_branch
          %151 = sbr.rel (%p149) target = $region24
        $region23: #{tpu_custom_call.1} parent=11 // pred_region
          _
        $region24: #{tpu_custom_call.1} parent=11 // pred_fallthru
          _
      $region12: #{tpu_custom_call.1} parent=5 // pred_fallthru
        _
      %p152 = scmp.lt.s32.totalorder %s13, 2
      // Predicated region
      $region25: #{tpu_custom_call.1} parent=5 // pred_check
        %p153 = pneg %p152
      $region26: #{tpu_custom_call.1} parent=5 // pred_check_branch
        %155 = sbr.rel (%p153) target = $region28
      $region27: #{tpu_custom_call.1} parent=5 // pred_region
        // Predicated region
        $region29: #{tpu_custom_call.1} parent=27 // pred_check
          %p156 = pneg %p33
        $region30: #{tpu_custom_call.1} parent=27 // pred_check_branch
          %158 = sbr.rel (%p156) target = $region32
        $region31: #{tpu_custom_call.1} parent=27 // pred_region
          %p159 = scmp.lt.s32.totalorder %s13, 1
          %s160 = scalar_select %p159, %s13, 1
          %s161 = smul.addr %s160, 8
          %s162 = smul.addr %s161, 8
          %s163 = scalar_lea.vmem %s0, %s162
        $region32: #{tpu_custom_call.1} parent=27 // pred_fallthru
          _
      $region28: #{tpu_custom_call.1} parent=5 // pred_fallthru
        _
      %p164 = scmp.le.s32.totalorder 1, %s13
      %p165 = scmp.lt.s32.totalorder %s13, 3
      %p166 = pnand %p164, %p165
      %p167 = pneg %p166
      // Predicated region
      $region33: #{tpu_custom_call.1} parent=5 // pred_check
        _
      $region34: #{tpu_custom_call.1} parent=5 // pred_check_branch
        %169 = sbr.rel (%p166) target = $region36
      $region35: #{tpu_custom_call.1} parent=5 // pred_region
        %s170 = ssub.s32 %s13, 1
        %p171 = scmp.lt.s32.totalorder %s18, 1
        %s172 = scalar_select %p171, %s18, 1
        %s173 = smul.addr %s172, 8
        %s174 = smul.addr %s173, 8
        %s175 = scalar_lea.vmem %s0, %s174
        %p176 = pneg %p39
        %p177 = pneg %p36
        %p178 = pneg %p60
        %p179 = pneg %p57
        %p180 = pneg %p81
        %p181 = pneg %p78
        %p182 = pneg %p102
        %p183 = pneg %p99
        %p184 = pneg %p128
        %p185 = pneg %p125
        %s186 = sand.u32 %s115, 1
        %s187 = scalar_lea.sflag [#allocation3], %s186
        %s188 = sand.u32 %s115, 1
        %s189 = smul.addr %s188, 32
        %s190 = scalar_lea.vmem [#allocation2], %s189
        %p191 = scmp.lt.s32.totalorder %s18, 1
        %s192 = scalar_select %p191, %s18, 1
        %s193 = smul.addr %s192, 8
        %s194 = smul.addr %s193, 8
        %s195 = scalar_lea.vmem %s0, %s194
        %v197 = vld [vmem:[%s195] sm:$0xff]
        %v198 = vld [vmem:[%s195 + $0x8] sm:$0xff]
        %v199 = vld [vmem:[%s195 + $0x10] sm:$0xff]
        %v200 = vld [vmem:[%s195 + $0x18] sm:$0xff]
        %v201 = vld [vmem:[%s195 + $0x20] sm:$0xff]
        %v202 = vld [vmem:[%s195 + $0x28] sm:$0xff]
        %v203 = vld [vmem:[%s195 + $0x30] sm:$0xff]
        %v204 = vld [vmem:[%s195 + $0x38] sm:$0xff]
        %vm205 = vcmask 261120
        %v206 = vsel %vm205, %v197, 0.0
        %v207 = vsel %vm205, %v198, 0.0
        %v208 = vadd.f32 %v206, %v207
        %v209 = vsel %vm205, %v199, 0.0
        %v210 = vadd.f32 %v208, %v209
        %v211 = vsel %vm205, %v200, 0.0
        %v212 = vadd.f32 %v210, %v211
        %v213 = vsel %vm205, %v201, 0.0
        %v214 = vadd.f32 %v212, %v213
        %v215 = vsel %vm205, %v202, 0.0
        %v216 = vadd.f32 %v214, %v215
        %v217 = vsel %vm205, %v203, 0.0
        %v218 = vadd.f32 %v216, %v217
        %v219 = vsel %vm205, %v204, 0.0
        %v220 = vadd.f32 %v218, %v219
        %v221 = vrcp.pop 8.0
        %v222 = vmul.f32 %v220, %v221
        %v223 = vrot.slane %v206, 4
        %v224 = vadd.f32 %v206, %v223
        %v225 = vrot.slane %v224, 2
        %v226 = vadd.f32 %v224, %v225
        %v227 = vrot.slane %v226, 1
        %v228 = vadd.f32 %v226, %v227
        %v229 = vrot.slane %v207, 4
        %v230 = vadd.f32 %v207, %v229
        %v231 = vrot.slane %v230, 2
        %v232 = vadd.f32 %v230, %v231
        %v233 = vrot.slane %v232, 1
        %v234 = vadd.f32 %v232, %v233
        %v235 = vrot.slane %v209, 4
        %v236 = vadd.f32 %v209, %v235
        %v237 = vrot.slane %v236, 2
        %v238 = vadd.f32 %v236, %v237
        %v239 = vrot.slane %v238, 1
        %v240 = vadd.f32 %v238, %v239
        %v241 = vrot.slane %v211, 4
        %v242 = vadd.f32 %v211, %v241
        %v243 = vrot.slane %v242, 2
        %v244 = vadd.f32 %v242, %v243
        %v245 = vrot.slane %v244, 1
        %v246 = vadd.f32 %v244, %v245
        %v247 = vrot.slane %v213, 4
        %v248 = vadd.f32 %v213, %v247
        %v249 = vrot.slane %v248, 2
        %v250 = vadd.f32 %v248, %v249
        %v251 = vrot.slane %v250, 1
        %v252 = vadd.f32 %v250, %v251
        %v253 = vrot.slane %v215, 4
        %v254 = vadd.f32 %v215, %v253
        %v255 = vrot.slane %v254, 2
        %v256 = vadd.f32 %v254, %v255
        %v257 = vrot.slane %v256, 1
        %v258 = vadd.f32 %v256, %v257
        %v259 = vrot.slane %v217, 4
        %v260 = vadd.f32 %v217, %v259
        %v261 = vrot.slane %v260, 2
        %v262 = vadd.f32 %v260, %v261
        %v263 = vrot.slane %v262, 1
        %v264 = vadd.f32 %v262, %v263
        %v265 = vrot.slane %v219, 4
        %v266 = vadd.f32 %v219, %v265
        %v267 = vrot.slane %v266, 2
        %v268 = vadd.f32 %v266, %v267
        %v269 = vrot.slane %v268, 1
        %v270 = vadd.f32 %v268, %v269
        %v271 = vmul.f32 %v228, %v221
        %v272 = vmul.f32 %v234, %v221
        %v273 = vmul.f32 %v240, %v221
        %v274 = vmul.f32 %v246, %v221
        %v275 = vmul.f32 %v252, %v221
        %v276 = vmul.f32 %v258, %v221
        %v277 = vmul.f32 %v264, %v221
        %v278 = vmul.f32 %v270, %v221
        %v280 = vcombine.high %v222, %v222
        %v282 = vunpack.c.l.s4 1966171168
        %v283 = vunpack.c.0.s8 %v282
        %v284 = vlaneseq
        %v285 = vshrl.u32 %v284, 7
        %v286 = vsub.s32 %v283, %v285
        %v287 = vrot.slane %v222, %v286
        %v289 = vunpack.c.l.s4 1966171168
        %v290 = vunpack.c.0.s8 %v289
        %v291 = vlaneseq
        %v292 = vshrl.u32 %v291, 7
        %v293 = vsub.s32 %v290, %v292
        %v294 = vrot.slane %v280, %v293
        %v295 = vcombine.high %v287, %v287
        %v296 = vcombine.high %v294, %v294
        %v298 = vunpack.c.l.s4 1966171168
        %v299 = vunpack.c.0.s8 %v298
        %v300 = vlaneseq
        %v301 = vshrl.u32 %v300, 7
        %v302 = vsub.s32 %v299, %v301
        %v303 = vrot.slane %v287, %v302
        %v305 = vunpack.c.l.s4 1966171168
        %v306 = vunpack.c.0.s8 %v305
        %v307 = vlaneseq
        %v308 = vshrl.u32 %v307, 7
        %v309 = vsub.s32 %v306, %v308
        %v310 = vrot.slane %v294, %v309
        %v312 = vunpack.c.l.s4 1966171168
        %v313 = vunpack.c.0.s8 %v312
        %v314 = vlaneseq
        %v315 = vshrl.u32 %v314, 7
        %v316 = vsub.s32 %v313, %v315
        %v317 = vrot.slane %v295, %v316
        %v319 = vunpack.c.l.s4 1966171168
        %v320 = vunpack.c.0.s8 %v319
        %v321 = vlaneseq
        %v322 = vshrl.u32 %v321, 7
        %v323 = vsub.s32 %v320, %v322
        %v324 = vrot.slane %v296, %v323
        %v325 = vcombine.high %v303, %v303
        %v326 = vcombine.high %v310, %v310
        %v327 = vcombine.high %v317, %v317
        %v328 = vcombine.high %v324, %v324
        %v329 = vlaneseq
        %v330 = vshrl.u32 %v329, 7
        %v331 = vsub.s32 0, %v330
        %v332 = vrot.slane %v303, %v331
        %v333 = vlaneseq
        %v334 = vshrl.u32 %v333, 7
        %v335 = vsub.s32 0, %v334
        %v336 = vrot.slane %v317, %v335
        %v337 = vlaneseq
        %v338 = vshrl.u32 %v337, 7
        %v339 = vsub.s32 0, %v338
        %v340 = vrot.slane %v325, %v339
        %v341 = vlaneseq
        %v342 = vshrl.u32 %v341, 7
        %v343 = vsub.s32 0, %v342
        %v344 = vrot.slane %v327, %v343
        %v345 = vlaneseq
        %v346 = vshrl.u32 %v345, 7
        %v347 = vsub.s32 0, %v346
        %v348 = vrot.slane %v310, %v347
        %v349 = vlaneseq
        %v350 = vshrl.u32 %v349, 7
        %v351 = vsub.s32 0, %v350
        %v352 = vrot.slane %v324, %v351
        %v353 = vlaneseq
        %v354 = vshrl.u32 %v353, 7
        %v355 = vsub.s32 0, %v354
        %v356 = vrot.slane %v326, %v355
        %v357 = vlaneseq
        %v358 = vshrl.u32 %v357, 7
        %v359 = vsub.s32 0, %v358
        %v360 = vrot.slane %v328, %v359
        %vm377 = vcmask 1041409
        %v378 = vsel %vm377, %v272, %v271
        %vm379 = vcmask 1042434
        %v380 = vsel %vm379, %v273, %v378
        %vm381 = vcmask 1043459
        %v382 = vsel %vm381, %v274, %v380
        %vm383 = vcmask 1044484
        %v384 = vsel %vm383, %v275, %v382
        %vm385 = vcmask 1045509
        %v386 = vsel %vm385, %v276, %v384
        %vm387 = vcmask 1046534
        %v388 = vsel %vm387, %v277, %v386
        %vm389 = vcmask 1047559
        %v390 = vsel %vm389, %v278, %v388
        %v392 = vmul.f32 %v332, %v390
        %v393 = vmul.f32 %v336, %v390
        %v394 = vmul.f32 %v340, %v390
        %v395 = vmul.f32 %v344, %v390
        %v396 = vmul.f32 %v348, %v390
        %v397 = vmul.f32 %v352, %v390
        %v398 = vmul.f32 %v356, %v390
        %v399 = vmul.f32 %v360, %v390
        %v400 = vpack.c.bf16 %v392, %v392
        %v401 = vpack.c.bf16 %v393, %v393
        %v402 = vpack.c.bf16 %v394, %v394
        %v403 = vpack.c.bf16 %v395, %v395
        %v404 = vpack.c.bf16 %v396, %v396
        %v405 = vpack.c.bf16 %v397, %v397
        %v406 = vpack.c.bf16 %v398, %v398
        %v407 = vpack.c.bf16 %v399, %v399
        %v408 = vld [vmem:[%s1] sm:$0xf]
        %v409 = vld [vmem:[%s1 + $0x4] sm:$0xf]
        %v410 = vld [vmem:[%s1 + $0x8] sm:$0xf]
        %v411 = vld [vmem:[%s1 + $0xc] sm:$0xf]
        %v412 = vld [vmem:[%s2] sm:$0xff]
        %v413 = vld [vmem:[%s2 + $0x8] sm:$0xff]
        %v414 = vld [vmem:[%s2 + $0x10] sm:$0xff]
        %v415 = vld [vmem:[%s2 + $0x18] sm:$0xff]
        %v417 = vsel %vm205, %v197, 0
        %v420 = vsel %vm205, %v198, 0
        %v423 = vsel %vm205, %v199, 0
        %v426 = vsel %vm205, %v200, 0
        %v429 = vsel %vm205, %v201, 0
        %v432 = vsel %vm205, %v202, 0
        %v435 = vsel %vm205, %v203, 0
        %v438 = vsel %vm205, %v204, 0
        %440 = vmatprep.subr.mxu0 0.0
        %441 = vmatpush1.msra.mxu0 %v412
        %442 = vmatprep.subr.mxu0 0.0
        %443 = vmatpush1.msra.mxu0 %v413
        %444 = vmatprep.subr.mxu0 0.0
        %445 = vmatpush1.msra.mxu0 %v414
        %446 = vmatprep.subr.mxu0 0.0
        %447 = vmatpush1.msra.mxu0 %v415
        %448 = vmatprep.subr.mxu0 0.0
        %449 = vmatpush1.msra.mxu0 0.0
        %450 = vmatprep.subr.mxu0 0.0
        %451 = vmatpush1.msra.mxu0 0.0
        %452 = vmatprep.subr.mxu0 0.0
        %453 = vmatpush1.msra.mxu0 0.0
        %454 = vmatprep.subr.mxu0 0.0
        %455 = vmatpush1.msra.mxu0 0.0
        %456 = vmatprep.subr.mxu0 0.0
        %457 = vmatpush1.msra.mxu0 0.0
        %458 = vmatprep.subr.mxu0 0.0
        %459 = vmatpush1.msra.mxu0 0.0
        %460 = vmatprep.subr.mxu0 0.0
        %461 = vmatpush1.msra.mxu0 0.0
        %462 = vmatprep.subr.mxu0 0.0
        %463 = vmatpush1.msra.mxu0 0.0
        %464 = vmatprep.subr.mxu0 0.0
        %465 = vmatpush1.msra.mxu0 0.0
        %466 = vmatprep.subr.mxu0 0.0
        %467 = vmatpush1.msra.mxu0 0.0
        %468 = vmatprep.subr.mxu0 0.0
        %469 = vmatpush1.msra.mxu0 0.0
        %470 = vmatprep.subr.mxu0 0.0
        %471 = vmatpush1.msra.mxu0 0.0
        %472 = vmatprep.subr.mxu0 0.0
        %473 = vmatpush1.msra.mxu0 0.0
        %474 = vmatprep.subr.mxu0 0.0
        %475 = vmatpush1.msra.mxu0 0.0
        %476 = vmatprep.subr.mxu0 0.0
        %477 = vmatpush1.msra.mxu0 0.0
        %478 = vmatprep.subr.mxu0 0.0
        %479 = vmatpush1.msra.mxu0 0.0
        %480 = vmatprep.subr.mxu0 0.0
        %481 = vmatpush1.msra.mxu0 0.0
        %482 = vmatprep.subr.mxu0 0.0
        %483 = vmatpush1.msra.mxu0 0.0
        %484 = vmatprep.subr.mxu0 0.0
        %485 = vmatpush1.msra.mxu0 0.0
        %486 = vmatprep.subr.mxu0 0.0
        %487 = vmatpush1.msra.mxu0 0.0
        %488 = vmatprep.subr.mxu0 0.0
        %489 = vmatpush1.msra.mxu0 0.0
        %490 = vmatprep.subr.mxu0 0.0
        %491 = vmatpush1.msra.mxu0 0.0
        %492 = vmatprep.subr.mxu0 0.0
        %493 = vmatpush1.msra.mxu0 0.0
        %494 = vmatprep.subr.mxu0 0.0
        %495 = vmatpush1.msra.mxu0 0.0
        %496 = vmatprep.subr.mxu0 0.0
        %497 = vmatpush1.msra.mxu0 0.0
        %498 = vmatprep.subr.mxu0 0.0
        %499 = vmatpush1.msra.mxu0 0.0
        %500 = vmatprep.subr.mxu0 0.0
        %501 = vmatpush1.msra.mxu0 0.0
        %502 = vmatprep.subr.mxu0 0.0
        %503 = vmatpush1.msra.mxu0 0.0
        %504 = vmatprep.mubr.f32.mxu0 0.0
        %505 = vmatmul.mubr.f32.gmra.mrb[0].mxu0 %v417
        %v506 = vpop.f32.mrb[0].mxu0
        %v507 = vadd.f32 0.0, %v506
        %v508 = vpop.f32.mrb[0].mxu0
        %509 = vmatprep.mubr.f32.mxu0 0.0
        %510 = vmatmul.mubr.f32.gmra.mrb[0].mxu0 %v420
        %v511 = vpop.f32.mrb[0].mxu0
        %v512 = vadd.f32 0.0, %v511
        %v513 = vpop.f32.mrb[0].mxu0
        %514 = vmatprep.mubr.f32.mxu0 0.0
        %515 = vmatmul.mubr.f32.gmra.mrb[0].mxu0 %v423
        %v516 = vpop.f32.mrb[0].mxu0
        %v517 = vadd.f32 0.0, %v516
        %v518 = vpop.f32.mrb[0].mxu0
        %519 = vmatprep.mubr.f32.mxu0 0.0
        %520 = vmatmul.mubr.f32.gmra.mrb[0].mxu0 %v426
        %v521 = vpop.f32.mrb[0].mxu0
        %v522 = vadd.f32 0.0, %v521
        %v523 = vpop.f32.mrb[0].mxu0
        %524 = vmatprep.mubr.f32.mxu0 0.0
        %525 = vmatmul.mubr.f32.gmra.mrb[0].mxu0 %v429
        %v526 = vpop.f32.mrb[0].mxu0
        %v527 = vadd.f32 0.0, %v526
        %v528 = vpop.f32.mrb[0].mxu0
        %529 = vmatprep.mubr.f32.mxu0 0.0
        %530 = vmatmul.mubr.f32.gmra.mrb[0].mxu0 %v432
        %v531 = vpop.f32.mrb[0].mxu0
        %v532 = vadd.f32 0.0, %v531
        %v533 = vpop.f32.mrb[0].mxu0
        %534 = vmatprep.mubr.f32.mxu0 0.0
        %535 = vmatmul.mubr.f32.gmra.mrb[0].mxu0 %v435
        %v536 = vpop.f32.mrb[0].mxu0
        %v537 = vadd.f32 0.0, %v536
        %v538 = vpop.f32.mrb[0].mxu0
        %539 = vmatprep.mubr.f32.mxu0 0.0
        %540 = vmatmul.mubr.f32.gmra.mrb[0].mxu0 %v438
        %v541 = vpop.f32.mrb[0].mxu0
        %v542 = vadd.f32 0.0, %v541
        %v543 = vpop.f32.mrb[0].mxu0
        %544 = vdwg.mxu0
        %v553 = vunpack.c.l.b16 %v400
        %v554 = vunpack.c.l.b16 %v401
        %v555 = vunpack.c.l.b16 %v402
        %v556 = vunpack.c.l.b16 %v403
        %v557 = vunpack.c.l.b16 %v404
        %v558 = vunpack.c.l.b16 %v405
        %v559 = vunpack.c.l.b16 %v406
        %v560 = vunpack.c.l.b16 %v407
        %v561 = vpack.c.b16 %v554, %v553
        %v562 = vpack.c.b16 %v556, %v555
        %v563 = vpack.c.b16 %v558, %v557
        %v564 = vpack.c.b16 %v560, %v559
        %v569 = vunpack.c.l.b16 %v408
        %v570 = vunpack.c.l.b16 %v409
        %v571 = vunpack.c.l.b16 %v410
        %v572 = vunpack.c.l.b16 %v411
        %v573 = vpack.c.b16 %v570, %v569
        %v574 = vpack.c.b16 %v572, %v571
        %v578 = vsel %vm205, %v561, 0
        %v581 = vsel %vm205, %v562, 0
        %v584 = vsel %vm205, %v563, 0
        %v587 = vsel %vm205, %v564, 0
        %589 = vmatprep.subr.bf16.mxu0 0
        %590 = vmatpush1.bf16.msra.mxu0 %v573
        %591 = vmatprep.subr.bf16.mxu0 0
        %592 = vmatpush1.bf16.msra.mxu0 %v574
        %593 = vmatprep.subr.bf16.mxu0 0
        %594 = vmatpush1.bf16.msra.mxu0 0
        %595 = vmatprep.subr.bf16.mxu0 0
        %596 = vmatpush1.bf16.msra.mxu0 0
        %597 = vmatprep.subr.bf16.mxu0 0
        %598 = vmatpush1.bf16.msra.mxu0 0
        %599 = vmatprep.subr.bf16.mxu0 0
        %600 = vmatpush1.bf16.msra.mxu0 0
        %601 = vmatprep.subr.bf16.mxu0 0
        %602 = vmatpush1.bf16.msra.mxu0 0
        %603 = vmatprep.subr.bf16.mxu0 0
        %604 = vmatpush1.bf16.msra.mxu0 0
        %605 = vmatprep.subr.bf16.mxu0 0
        %606 = vmatpush1.bf16.msra.mxu0 0
        %607 = vmatprep.subr.bf16.mxu0 0
        %608 = vmatpush1.bf16.msra.mxu0 0
        %609 = vmatprep.subr.bf16.mxu0 0
        %610 = vmatpush1.bf16.msra.mxu0 0
        %611 = vmatprep.subr.bf16.mxu0 0
        %612 = vmatpush1.bf16.msra.mxu0 0
        %613 = vmatprep.subr.bf16.mxu0 0
        %614 = vmatpush1.bf16.msra.mxu0 0
        %615 = vmatprep.subr.bf16.mxu0 0
        %616 = vmatpush1.bf16.msra.mxu0 0
        %617 = vmatprep.subr.bf16.mxu0 0
        %618 = vmatpush1.bf16.msra.mxu0 0
        %619 = vmatprep.subr.bf16.mxu0 0
        %620 = vmatpush1.bf16.msra.mxu0 0
        %621 = vmatprep.mubr.bf16.mxu0 0
        %622 = vmatmul.mubr.bf16.gmra.mrb[0].mxu0 %v578
        %v623 = vpop.f32.mrb[0].mxu0
        %v624 = vadd.f32 %v507, %v623
        %v625 = vpop.f32.mrb[0].mxu0
        %v626 = vpop.f32.mrb[0].mxu0
        %v627 = vadd.f32 %v512, %v626
        %v628 = vpop.f32.mrb[0].mxu0
        %629 = vmatprep.mubr.bf16.mxu0 0
        %630 = vmatmul.mubr.bf16.gmra.mrb[0].mxu0 %v581
        %v631 = vpop.f32.mrb[0].mxu0
        %v632 = vadd.f32 %v517, %v631
        %v633 = vpop.f32.mrb[0].mxu0
        %v634 = vpop.f32.mrb[0].mxu0
        %v635 = vadd.f32 %v522, %v634
        %v636 = vpop.f32.mrb[0].mxu0
        %637 = vmatprep.mubr.bf16.mxu0 0
        %638 = vmatmul.mubr.bf16.gmra.mrb[0].mxu0 %v584
        %v639 = vpop.f32.mrb[0].mxu0
        %v640 = vadd.f32 %v527, %v639
        %v641 = vpop.f32.mrb[0].mxu0
        %v642 = vpop.f32.mrb[0].mxu0
        %v643 = vadd.f32 %v532, %v642
        %v644 = vpop.f32.mrb[0].mxu0
        %645 = vmatprep.mubr.bf16.mxu0 0
        %646 = vmatmul.mubr.bf16.gmra.mrb[0].mxu0 %v587
        %v647 = vpop.f32.mrb[0].mxu0
        %v648 = vadd.f32 %v537, %v647
        %v649 = vpop.f32.mrb[0].mxu0
        %v650 = vpop.f32.mrb[0].mxu0
        %v651 = vadd.f32 %v542, %v650
        %v652 = vpop.f32.mrb[0].mxu0
        %653 = vdwg.mxu0
        %v654 = vld [vmem:[%s3] sm:$0x1]
        %v656 = vlaneseq
        %v657 = vshrl.u32 %v656, 7
        %v658 = vsub.s32 0, %v657
        %v659 = vrot.slane %v654, %v658
        %v661 = vadd.f32 %v624, %v659
        %v662 = vadd.f32 %v627, %v659
        %v663 = vadd.f32 %v632, %v659
        %v664 = vadd.f32 %v635, %v659
        %v665 = vadd.f32 %v640, %v659
        %v666 = vadd.f32 %v643, %v659
        %v667 = vadd.f32 %v648, %v659
        %v668 = vadd.f32 %v651, %v659
        %v669 = vxor.u32 %v661, 2147483648
        %v670 = vxor.u32 %v662, 2147483648
        %v671 = vxor.u32 %v663, 2147483648
        %v672 = vxor.u32 %v664, 2147483648
        %v673 = vxor.u32 %v665, 2147483648
        %v674 = vxor.u32 %v666, 2147483648
        %v675 = vxor.u32 %v667, 2147483648
        %v676 = vxor.u32 %v668, 2147483648
        %v677 = vmul.f32 %v669, 1.442695
        %v678 = vpow.pop %v677
        %v679 = vmul.f32 %v670, 1.442695
        %v680 = vpow.pop %v679
        %v681 = vmul.f32 %v671, 1.442695
        %v682 = vpow.pop %v681
        %v683 = vmul.f32 %v672, 1.442695
        %v684 = vpow.pop %v683
        %v685 = vmul.f32 %v673, 1.442695
        %v686 = vpow.pop %v685
        %v687 = vmul.f32 %v674, 1.442695
        %v688 = vpow.pop %v687
        %v689 = vmul.f32 %v675, 1.442695
        %v690 = vpow.pop %v689
        %v691 = vmul.f32 %v676, 1.442695
        %v692 = vpow.pop %v691
        %v693 = vadd.f32 %v678, 1.0
        %v694 = vadd.f32 %v680, 1.0
        %v695 = vadd.f32 %v682, 1.0
        %v696 = vadd.f32 %v684, 1.0
        %v697 = vadd.f32 %v686, 1.0
        %v698 = vadd.f32 %v688, 1.0
        %v699 = vadd.f32 %v690, 1.0
        %v700 = vadd.f32 %v692, 1.0
        %v701 = vrcp.pop %v693
        %v702 = vmul.f32 1.0, %v701
        %v703 = vrcp.pop %v694
        %v704 = vmul.f32 1.0, %v703
        %v705 = vrcp.pop %v695
        %v706 = vmul.f32 1.0, %v705
        %v707 = vrcp.pop %v696
        %v708 = vmul.f32 1.0, %v707
        %v709 = vrcp.pop %v697
        %v710 = vmul.f32 1.0, %v709
        %v711 = vrcp.pop %v698
        %v712 = vmul.f32 1.0, %v711
        %v713 = vrcp.pop %v699
        %v714 = vmul.f32 1.0, %v713
        %v715 = vrcp.pop %v700
        %v716 = vmul.f32 1.0, %v715
        %717 = vxpose.xlu0.b32.start [1/16] %v702, 128
        %718 = vxpose.xlu0.b32.cont [2/16] %v704, 128
        %719 = vxpose.xlu0.b32.cont [3/16] %v706, 128
        %720 = vxpose.xlu0.b32.cont [4/16] %v708, 128
        %721 = vxpose.xlu0.b32.cont [5/16] %v710, 128
        %722 = vxpose.xlu0.b32.cont [6/16] %v712, 128
        %723 = vxpose.xlu0.b32.cont [7/16] %v714, 128
        %724 = vxpose.xlu0.b32.cont [8/16] %v716, 128
        %725 = vxpose.xlu0.b32.cont [9/16] 0.0, 128
        %726 = vxpose.xlu0.b32.cont [10/16] 0.0, 128
        %727 = vxpose.xlu0.b32.cont [11/16] 0.0, 128
        %728 = vxpose.xlu0.b32.cont [12/16] 0.0, 128
        %729 = vxpose.xlu0.b32.cont [13/16] 0.0, 128
        %730 = vxpose.xlu0.b32.cont [14/16] 0.0, 128
        %731 = vxpose.xlu0.b32.cont [15/16] 0.0, 128
        %732 = vxpose.xlu0.b32.end [16/16] 0.0, 128
        %v733 = vpop.trf.xlu0
        %v734 = vpop.trf.xlu0
        %v735 = vpop.trf.xlu0
        %v736 = vpop.trf.xlu0
        %v737 = vpop.trf.xlu0
        %v738 = vpop.trf.xlu0
        %v739 = vpop.trf.xlu0
        %v740 = vpop.trf.xlu0
        %v741 = vpop.trf.xlu0
        %v742 = vpop.trf.xlu0
        %v743 = vpop.trf.xlu0
        %v744 = vpop.trf.xlu0
        %v745 = vpop.trf.xlu0
        %v746 = vpop.trf.xlu0
        %v747 = vpop.trf.xlu0
        %v748 = vpop.trf.xlu0
        %vm749 = vcmask 523264
        %750 = vst.msk [vmem:[%s190] sm:$0xff] %vm749, %v733
        %751 = vst.msk [vmem:[%s190 + $0x8] sm:$0xff] %vm749, %v734
        %752 = vst.msk [vmem:[%s190 + $0x10] sm:$0xff] %vm749, %v735
        %753 = vst.msk [vmem:[%s190 + $0x18] sm:$0xff] %vm749, %v736
        %s754 = sand.u32 %s115, 1
        %s755 = scalar_lea.sflag [#allocation3], %s754
        %s756 = sand.u32 %s115, 1
        %s757 = smul.addr %s756, 32
        %s758 = scalar_lea.vmem [#allocation2], %s757
        // Predicated region
        $region37: #{tpu_custom_call.1} parent=35 // pred_check
          %p759 = pneg %p125
        $region38: #{tpu_custom_call.1} parent=35 // pred_check_branch
          %761 = sbr.rel (%p759) target = $region40
        $region39: #{tpu_custom_call.1} parent=35 // pred_region
          %s763 = ssub.s32 512, 512
          %764 = vsyncadd %s755, %s763
          %s765 = smul.addr %s18, 4
          %s766 = smul.addr %s765, 128
          %s767 = scalar_lea.hbm %s4, %s766
          %s768 = sshll.u32 %s758, 4
          %s769 = int_to_ptr.vmem [resolvable:$true] %s768
          %774 = dma.vmem_to_hbm [thread:$0]  %s769, 512, %s767, %s755, 128, 128, 8
        $region40: #{tpu_custom_call.1} parent=35 // pred_fallthru
          _
      $region36: #{tpu_custom_call.1} parent=5 // pred_fallthru
        _
      %p775 = scmp.le.s32.totalorder 2, %s13
      // Predicated region
      $region41: #{tpu_custom_call.1} parent=5 // pred_check
        %p776 = pneg %p775
      $region42: #{tpu_custom_call.1} parent=5 // pred_check_branch
        %778 = sbr.rel (%p776) target = $region44
      $region43: #{tpu_custom_call.1} parent=5 // pred_region
        %s779 = ssub.s32 %s13, 2
        // Predicated region
        $region45: #{tpu_custom_call.1} parent=43 // pred_check
          %p780 = pneg %p131
        $region46: #{tpu_custom_call.1} parent=43 // pred_check_branch
          %782 = sbr.rel (%p780) target = $region48
        $region47: #{tpu_custom_call.1} parent=43 // pred_region
          %s783 = sand.u32 %s116, 1
          %s784 = scalar_lea.sflag [#allocation3], %s783
          %s785 = sand.u32 %s116, 1
          %s786 = smul.addr %s785, 32
          %s787 = scalar_lea.vmem [#allocation2], %s786
          %788 = dma.done %s784, 512
        $region48: #{tpu_custom_call.1} parent=43 // pred_fallthru
          _
      $region44: #{tpu_custom_call.1} parent=5 // pred_fallthru
        _
    $region6: #{tpu_custom_call.1} parent=1 // loop_footer
      %s17 = sadd.s32 1, %s13
    $region7: #{tpu_custom_call.1} parent=1 // loop_footer_branch
      %12 = sbr.rel target = $region3
    $region8: #{tpu_custom_call.1} parent=1 // loop_exit
      _
    %789 = vsyncpa [#allocation3], 1
    %s790 = scalar_lea.sflag [#allocation3], 1
    %791 = vsyncpa %s790, 1

</llo_original>
